<compile_context>
chip_gen: v7x
topology: tpu7x:2x2x1
jax: 0.10.0
libtpu: 0.0.40
codegen_flags: <defaults>
</compile_context>

<pallas_src>
import jax
import jax.numpy as jnp
from jax.experimental import pallas as pl
from jax.experimental.pallas import tpu as pltpu


def _time_attention_kernel(w_ref, x_ref, o_ref):
    # w_ref: (P*T*F, P*F) block-diagonal softmaxed weights (resident across grid)
    # x_ref: (tile_p, P*T*F) packed input rows
    # o_ref: (tile_p, P*F)   packed output rows (lane-dense when P*F == 128)
    o_ref[...] = jnp.dot(
        x_ref[...].astype(jnp.float32),
        w_ref[...],
        preferred_element_type=jnp.float32,
    ).astype(o_ref.dtype)


def time_attention(x, weights, *, target_block_bytes=2 * 1024 * 1024):
    """x: (B, S, T, F); weights: (T,) raw (un-softmaxed) -> (B, S, F)."""
    B, S, T, F = x.shape
    R = B * S

    # Softmax once, outside the kernel (T-length op; negligible).
    attn = jax.nn.softmax(weights.astype(jnp.float32), axis=0)

    # Pack P consecutive rows per kernel row so the output last dim is 128-wide.
    P = 128 // F if (F < 128 and 128 % F == 0) else 1

    x_flat = x.reshape(R, T * F)                       # contiguous, zero-copy
    R_pad = ((R + P - 1) // P) * P
    if R_pad != R:
        # TODO(synk): this pad copies x once; only hit when (B*S) % P != 0.
        x_flat = jnp.pad(x_flat, ((0, R_pad - R), (0, 0)))
    Rp = R_pad // P
    row_w = P * T * F
    out_w = P * F
    x_packed = x_flat.reshape(Rp, row_w)               # contiguous, zero-copy

    # Block-diagonal weight matrix: W[c*T*F + t*F + f, c*F + f] = attn[t].
    w_block = jnp.repeat(attn, F)[:, None] * jnp.tile(
        jnp.eye(F, dtype=jnp.float32), (T, 1))                       # (T*F, F)
    w_mat = w_block if P == 1 else jnp.kron(
        jnp.eye(P, dtype=jnp.float32), w_block)                      # (P*T*F, P*F)

    # Row-tile sizing: ~target_block_bytes per input block, sublane-aligned.
    itemsize = jnp.dtype(x.dtype).itemsize
    row_bytes = row_w * itemsize
    tile_p = max(1, target_block_bytes // row_bytes)
    if tile_p >= Rp or Rp <= 8:
        tile_p = Rp                                    # full extent (always legal)
    else:
        tile_p = min(max(8, (tile_p // 8) * 8), Rp)
    grid = (pl.cdiv(Rp, tile_p),)

    out_packed = pl.pallas_call(
        _time_attention_kernel,
        out_shape=jax.ShapeDtypeStruct((Rp, out_w), x.dtype),
        grid_spec=pltpu.PrefetchScalarGridSpec(
            num_scalar_prefetch=0,
            grid=grid,
            in_specs=[
                pl.BlockSpec((row_w, out_w), lambda i: (0, 0)),      # W (resident)
                pl.BlockSpec((tile_p, row_w), lambda i: (i, 0)),     # packed x tile
            ],
            out_specs=pl.BlockSpec((tile_p, out_w), lambda i: (i, 0)),
        ),
        compiler_params=pltpu.CompilerParams(
            dimension_semantics=("parallel",),
        ),
    )(w_mat, x_packed)

    return out_packed.reshape(R_pad, F)[:R].reshape(B, S, F)


if __name__ == "__main__":
    # Small shapes consistent with the module: batch=2, seq=8, steps=8, feat=32.
    B, S, T, F = 2, 8, 8, 32

    key = jax.random.PRNGKey(0)
    kx, kw = jax.random.split(key)
    x = jax.random.normal(kx, (B, S, T, F), dtype=jnp.float32)
    # nn.Parameter(torch.zeros(steps)) initializes to zeros; perturb so the
    # softmax path is nontrivial.
    weights = 0.1 * jax.random.normal(kw, (T,), dtype=jnp.float32)

    fn = jax.jit(time_attention)
    out = jax.block_until_ready(fn(x, weights))

    # Pure-JAX reference (elementwise multiply + sum; avoids any matmul path).
    attn_ref = jax.nn.softmax(weights.astype(jnp.float32), axis=0)
    ref = jnp.sum(x * attn_ref[None, None, :, None], axis=2)
    assert out.shape == (B, S, F)
    assert jnp.allclose(out, ref, atol=1e-5, rtol=1e-5), "mismatch vs reference"

    print("KERNEL_OK")
</pallas_src>

<mosaic_0001>
module attributes {stable_mosaic.version = 11 : i64} {
  func.func @_time_attention_kernel(%arg0: i32, %arg1: memref<1024x128xf32, #tpu.memory_space<vmem>>, %arg2: memref<4x1024xf32, #tpu.memory_space<vmem>>, %arg3: memref<4x128xf32, #tpu.memory_space<vmem>>) attributes {dimension_semantics = [#tpu.dimension_semantics<parallel>], iteration_bounds = array<i64: 1>, scalar_prefetch = 0 : i64, scratch_operands = 0 : i64, tpu.core_type = #tpu.core_type<tc>, window_params = [{pipeline_mode = #tpu.pipeline_mode<synchronous>, transform_indices = @transform_0, window_bounds = array<i64: 1024, 128>}, {transform_indices = @transform_1, window_bounds = array<i64: 4, 1024>}, {transform_indices = @transform_2, window_bounds = array<i64: 4, 128>}]} {
    %c0 = arith.constant 0 : index
    %c0_0 = arith.constant 0 : index
    %0 = vector.load %arg2[%c0, %c0_0] : memref<4x1024xf32, #tpu.memory_space<vmem>>, vector<4x1024xf32>
    %c0_1 = arith.constant 0 : index
    %c0_2 = arith.constant 0 : index
    %1 = vector.load %arg1[%c0_1, %c0_2] : memref<1024x128xf32, #tpu.memory_space<vmem>>, vector<1024x128xf32>
    %cst = arith.constant dense<0.000000e+00> : vector<4x128xf32>
    %2 = tpu.matmul %0, %1, %cst {dimension_numbers = #tpu.dot_dimension_numbers<[1], [0], [0], [1], [0, 0, 1, 1], [], []>} : vector<4x1024xf32>, vector<1024x128xf32>, vector<4x128xf32> -> vector<4x128xf32>
    %c0_3 = arith.constant 0 : index
    %c0_4 = arith.constant 0 : index
    %3 = vector.load %arg3[%c0_3, %c0_4] : memref<4x128xf32, #tpu.memory_space<vmem>>, vector<4x128xf32>
    tpu.vector_store %arg3[%c0_3, %c0_4], %2 {strides = array<i32>} : memref<4x128xf32, #tpu.memory_space<vmem>>, vector<4x128xf32>,
    return
  }
  func.func @transform_0(%arg0: i32) -> (i32, i32) {
    %c0_i32 = arith.constant 0 : i32
    %c0_i32_0 = arith.constant 0 : i32
    %c0_i32_1 = arith.constant 0 : i32
    return %c0_i32, %c0_i32_0 : i32, i32
  }
  func.func @transform_1(%arg0: i32) -> (i32, i32) {
    %c0_i32 = arith.constant 0 : i32
    %c0_i32_0 = arith.constant 0 : i32
    return %arg0, %c0_i32 : i32, i32
  }
  func.func @transform_2(%arg0: i32) -> (i32, i32) {
    %c0_i32 = arith.constant 0 : i32
    %c0_i32_0 = arith.constant 0 : i32
    return %arg0, %c0_i32 : i32, i32
  }
}

</mosaic_0001>

<llo_original>
// kernel: time_attention.1
$region0: #{time_attention.1}
  #allocation0 [shape = 'u32[]', space=smem, size = 0x4, offset = 0x4, fixed_abs, tag = 'smem constant byte address 0x4 - core index']
  #allocation1 [shape = 'u32[144,128]{1,0:T(1,128)}', space=vmem, size = 0x12000, scoped, tag = 'internal scratch']
  %s0 = inlined_call_operand.vmem [shape: f32[1024,128], index: 0, kind: input, shape index: {}]
  %s1 = inlined_call_operand.vmem [shape: f32[4,1024], index: 1, kind: input, shape index: {}]
  %s2 = inlined_call_operand.vmem [shape: f32[4,128], index: 2, kind: output, shape index: {}]
  %s3 = sld [smem:[#allocation0]]
  $region18: #{time_attention.1} parent=0
    _
  %s5 = ssub.s32 1, %s3
  %s6 = scalar_select 0, %s5, %s3
  // Predicated region
  $region2: #{time_attention.1} parent=0 // pred_check
    _
  $region3: #{time_attention.1} parent=0 // pred_check_branch
    %8 = sbr.rel (0) target = $region5
  $region4: #{time_attention.1} parent=0 // pred_region
    _
  $region5: #{time_attention.1} parent=0 // pred_fallthru
    _
  // Predicated region
  $region6: #{time_attention.1} parent=0 // pred_check
    _
  $region7: #{time_attention.1} parent=0 // pred_check_branch
    %10 = sbr.rel (0) target = $region9
  $region8: #{time_attention.1} parent=0 // pred_region
    _
  $region9: #{time_attention.1} parent=0 // pred_fallthru
    _
  %v11 = vld [vmem:[%s1] sm:$0xff]
  %v12 = vld [vmem:[%s1 + $0x8] sm:$0xff]
  %v13 = vld [vmem:[%s1 + $0x10] sm:$0xff]
  %v14 = vld [vmem:[%s1 + $0x18] sm:$0xff]
  %v15 = vld [vmem:[%s0] sm:$0xff]
  %v16 = vld [vmem:[%s0 + $0x8] sm:$0xff]
  %v17 = vld [vmem:[%s0 + $0x10] sm:$0xff]
  %v18 = vld [vmem:[%s0 + $0x18] sm:$0xff]
  %v19 = vld [vmem:[%s0 + $0x20] sm:$0xff]
  %v20 = vld [vmem:[%s0 + $0x28] sm:$0xff]
  %v21 = vld [vmem:[%s0 + $0x30] sm:$0xff]
  %v22 = vld [vmem:[%s0 + $0x38] sm:$0xff]
  %v23 = vld [vmem:[%s0 + $0x40] sm:$0xff]
  %v24 = vld [vmem:[%s0 + $0x48] sm:$0xff]
  %v25 = vld [vmem:[%s0 + $0x50] sm:$0xff]
  %v26 = vld [vmem:[%s0 + $0x58] sm:$0xff]
  %v27 = vld [vmem:[%s0 + $0x60] sm:$0xff]
  %v28 = vld [vmem:[%s0 + $0x68] sm:$0xff]
  %v29 = vld [vmem:[%s0 + $0x70] sm:$0xff]
  %v30 = vld [vmem:[%s0 + $0x78] sm:$0xff]
  %v31 = vld [vmem:[%s0 + $0x80] sm:$0xff]
  %v32 = vld [vmem:[%s0 + $0x88] sm:$0xff]
  %v33 = vld [vmem:[%s0 + $0x90] sm:$0xff]
  %v34 = vld [vmem:[%s0 + $0x98] sm:$0xff]
  %v35 = vld [vmem:[%s0 + $0xa0] sm:$0xff]
  %v36 = vld [vmem:[%s0 + $0xa8] sm:$0xff]
  %v37 = vld [vmem:[%s0 + $0xb0] sm:$0xff]
  %v38 = vld [vmem:[%s0 + $0xb8] sm:$0xff]
  %v39 = vld [vmem:[%s0 + $0xc0] sm:$0xff]
  %v40 = vld [vmem:[%s0 + $0xc8] sm:$0xff]
  %v41 = vld [vmem:[%s0 + $0xd0] sm:$0xff]
  %v42 = vld [vmem:[%s0 + $0xd8] sm:$0xff]
  %v43 = vld [vmem:[%s0 + $0xe0] sm:$0xff]
  %v44 = vld [vmem:[%s0 + $0xe8] sm:$0xff]
  %v45 = vld [vmem:[%s0 + $0xf0] sm:$0xff]
  %v46 = vld [vmem:[%s0 + $0xf8] sm:$0xff]
  %v47 = vld [vmem:[%s0 + $0x100] sm:$0xff]
  %v48 = vld [vmem:[%s0 + $0x108] sm:$0xff]
  %v49 = vld [vmem:[%s0 + $0x110] sm:$0xff]
  %v50 = vld [vmem:[%s0 + $0x118] sm:$0xff]
  %v51 = vld [vmem:[%s0 + $0x120] sm:$0xff]
  %v52 = vld [vmem:[%s0 + $0x128] sm:$0xff]
  %v53 = vld [vmem:[%s0 + $0x130] sm:$0xff]
  %v54 = vld [vmem:[%s0 + $0x138] sm:$0xff]
  %v55 = vld [vmem:[%s0 + $0x140] sm:$0xff]
  %v56 = vld [vmem:[%s0 + $0x148] sm:$0xff]
  %v57 = vld [vmem:[%s0 + $0x150] sm:$0xff]
  %v58 = vld [vmem:[%s0 + $0x158] sm:$0xff]
  %v59 = vld [vmem:[%s0 + $0x160] sm:$0xff]
  %v60 = vld [vmem:[%s0 + $0x168] sm:$0xff]
  %v61 = vld [vmem:[%s0 + $0x170] sm:$0xff]
  %v62 = vld [vmem:[%s0 + $0x178] sm:$0xff]
  %v63 = vld [vmem:[%s0 + $0x180] sm:$0xff]
  %v64 = vld [vmem:[%s0 + $0x188] sm:$0xff]
  %v65 = vld [vmem:[%s0 + $0x190] sm:$0xff]
  %v66 = vld [vmem:[%s0 + $0x198] sm:$0xff]
  %v67 = vld [vmem:[%s0 + $0x1a0] sm:$0xff]
  %v68 = vld [vmem:[%s0 + $0x1a8] sm:$0xff]
  %v69 = vld [vmem:[%s0 + $0x1b0] sm:$0xff]
  %v70 = vld [vmem:[%s0 + $0x1b8] sm:$0xff]
  %v71 = vld [vmem:[%s0 + $0x1c0] sm:$0xff]
  %v72 = vld [vmem:[%s0 + $0x1c8] sm:$0xff]
  %v73 = vld [vmem:[%s0 + $0x1d0] sm:$0xff]
  %v74 = vld [vmem:[%s0 + $0x1d8] sm:$0xff]
  %v75 = vld [vmem:[%s0 + $0x1e0] sm:$0xff]
  %v76 = vld [vmem:[%s0 + $0x1e8] sm:$0xff]
  %v77 = vld [vmem:[%s0 + $0x1f0] sm:$0xff]
  %v78 = vld [vmem:[%s0 + $0x1f8] sm:$0xff]
  %v79 = vld [vmem:[%s0 + $0x200] sm:$0xff]
  %v80 = vld [vmem:[%s0 + $0x208] sm:$0xff]
  %v81 = vld [vmem:[%s0 + $0x210] sm:$0xff]
  %v82 = vld [vmem:[%s0 + $0x218] sm:$0xff]
  %v83 = vld [vmem:[%s0 + $0x220] sm:$0xff]
  %v84 = vld [vmem:[%s0 + $0x228] sm:$0xff]
  %v85 = vld [vmem:[%s0 + $0x230] sm:$0xff]
  %v86 = vld [vmem:[%s0 + $0x238] sm:$0xff]
  %v87 = vld [vmem:[%s0 + $0x240] sm:$0xff]
  %v88 = vld [vmem:[%s0 + $0x248] sm:$0xff]
  %v89 = vld [vmem:[%s0 + $0x250] sm:$0xff]
  %v90 = vld [vmem:[%s0 + $0x258] sm:$0xff]
  %v91 = vld [vmem:[%s0 + $0x260] sm:$0xff]
  %v92 = vld [vmem:[%s0 + $0x268] sm:$0xff]
  %v93 = vld [vmem:[%s0 + $0x270] sm:$0xff]
  %v94 = vld [vmem:[%s0 + $0x278] sm:$0xff]
  %v95 = vld [vmem:[%s0 + $0x280] sm:$0xff]
  %v96 = vld [vmem:[%s0 + $0x288] sm:$0xff]
  %v97 = vld [vmem:[%s0 + $0x290] sm:$0xff]
  %v98 = vld [vmem:[%s0 + $0x298] sm:$0xff]
  %v99 = vld [vmem:[%s0 + $0x2a0] sm:$0xff]
  %v100 = vld [vmem:[%s0 + $0x2a8] sm:$0xff]
  %v101 = vld [vmem:[%s0 + $0x2b0] sm:$0xff]
  %v102 = vld [vmem:[%s0 + $0x2b8] sm:$0xff]
  %v103 = vld [vmem:[%s0 + $0x2c0] sm:$0xff]
  %v104 = vld [vmem:[%s0 + $0x2c8] sm:$0xff]
  %v105 = vld [vmem:[%s0 + $0x2d0] sm:$0xff]
  %v106 = vld [vmem:[%s0 + $0x2d8] sm:$0xff]
  %v107 = vld [vmem:[%s0 + $0x2e0] sm:$0xff]
  %v108 = vld [vmem:[%s0 + $0x2e8] sm:$0xff]
  %v109 = vld [vmem:[%s0 + $0x2f0] sm:$0xff]
  %v110 = vld [vmem:[%s0 + $0x2f8] sm:$0xff]
  %v111 = vld [vmem:[%s0 + $0x300] sm:$0xff]
  %v112 = vld [vmem:[%s0 + $0x308] sm:$0xff]
  %v113 = vld [vmem:[%s0 + $0x310] sm:$0xff]
  %v114 = vld [vmem:[%s0 + $0x318] sm:$0xff]
  %v115 = vld [vmem:[%s0 + $0x320] sm:$0xff]
  %v116 = vld [vmem:[%s0 + $0x328] sm:$0xff]
  %v117 = vld [vmem:[%s0 + $0x330] sm:$0xff]
  %v118 = vld [vmem:[%s0 + $0x338] sm:$0xff]
  %v119 = vld [vmem:[%s0 + $0x340] sm:$0xff]
  %v120 = vld [vmem:[%s0 + $0x348] sm:$0xff]
  %v121 = vld [vmem:[%s0 + $0x350] sm:$0xff]
  %v122 = vld [vmem:[%s0 + $0x358] sm:$0xff]
  %v123 = vld [vmem:[%s0 + $0x360] sm:$0xff]
  %v124 = vld [vmem:[%s0 + $0x368] sm:$0xff]
  %v125 = vld [vmem:[%s0 + $0x370] sm:$0xff]
  %v126 = vld [vmem:[%s0 + $0x378] sm:$0xff]
  %v127 = vld [vmem:[%s0 + $0x380] sm:$0xff]
  %v128 = vld [vmem:[%s0 + $0x388] sm:$0xff]
  %v129 = vld [vmem:[%s0 + $0x390] sm:$0xff]
  %v130 = vld [vmem:[%s0 + $0x398] sm:$0xff]
  %v131 = vld [vmem:[%s0 + $0x3a0] sm:$0xff]
  %v132 = vld [vmem:[%s0 + $0x3a8] sm:$0xff]
  %v133 = vld [vmem:[%s0 + $0x3b0] sm:$0xff]
  %v134 = vld [vmem:[%s0 + $0x3b8] sm:$0xff]
  %v135 = vld [vmem:[%s0 + $0x3c0] sm:$0xff]
  %v136 = vld [vmem:[%s0 + $0x3c8] sm:$0xff]
  %v137 = vld [vmem:[%s0 + $0x3d0] sm:$0xff]
  %v138 = vld [vmem:[%s0 + $0x3d8] sm:$0xff]
  %v139 = vld [vmem:[%s0 + $0x3e0] sm:$0xff]
  %v140 = vld [vmem:[%s0 + $0x3e8] sm:$0xff]
  %v141 = vld [vmem:[%s0 + $0x3f0] sm:$0xff]
  %v142 = vld [vmem:[%s0 + $0x3f8] sm:$0xff]
  %v147 = vcombine.high %v11, %v11
  %v148 = vcombine.high %v12, %v12
  %v149 = vcombine.high %v13, %v13
  %v150 = vcombine.high %v14, %v14
  %155 = vmatprep.subr.mxu0 0.0
  %156 = vmatpush1.msra.mxu0 %v15
  %157 = vmatprep.subr.mxu0 0.0
  %158 = vmatpush1.msra.mxu0 %v16
  %159 = vmatprep.subr.mxu0 0.0
  %160 = vmatpush1.msra.mxu0 %v17
  %161 = vmatprep.subr.mxu0 0.0
  %162 = vmatpush1.msra.mxu0 %v18
  %163 = vmatprep.subr.mxu0 0.0
  %164 = vmatpush1.msra.mxu0 %v19
  %165 = vmatprep.subr.mxu0 0.0
  %166 = vmatpush1.msra.mxu0 %v20
  %167 = vmatprep.subr.mxu0 0.0
  %168 = vmatpush1.msra.mxu0 %v21
  %169 = vmatprep.subr.mxu0 0.0
  %170 = vmatpush1.msra.mxu0 %v22
  %171 = vmatprep.subr.mxu0 0.0
  %172 = vmatpush1.msra.mxu0 %v23
  %173 = vmatprep.subr.mxu0 0.0
  %174 = vmatpush1.msra.mxu0 %v24
  %175 = vmatprep.subr.mxu0 0.0
  %176 = vmatpush1.msra.mxu0 %v25
  %177 = vmatprep.subr.mxu0 0.0
  %178 = vmatpush1.msra.mxu0 %v26
  %179 = vmatprep.subr.mxu0 0.0
  %180 = vmatpush1.msra.mxu0 %v27
  %181 = vmatprep.subr.mxu0 0.0
  %182 = vmatpush1.msra.mxu0 %v28
  %183 = vmatprep.subr.mxu0 0.0
  %184 = vmatpush1.msra.mxu0 %v29
  %185 = vmatprep.subr.mxu0 0.0
  %186 = vmatpush1.msra.mxu0 %v30
  %187 = vmatprep.subr.mxu0 0.0
  %188 = vmatpush1.msra.mxu0 %v31
  %189 = vmatprep.subr.mxu0 0.0
  %190 = vmatpush1.msra.mxu0 %v32
  %191 = vmatprep.subr.mxu0 0.0
  %192 = vmatpush1.msra.mxu0 %v33
  %193 = vmatprep.subr.mxu0 0.0
  %194 = vmatpush1.msra.mxu0 %v34
  %195 = vmatprep.subr.mxu0 0.0
  %196 = vmatpush1.msra.mxu0 %v35
  %197 = vmatprep.subr.mxu0 0.0
  %198 = vmatpush1.msra.mxu0 %v36
  %199 = vmatprep.subr.mxu0 0.0
  %200 = vmatpush1.msra.mxu0 %v37
  %201 = vmatprep.subr.mxu0 0.0
  %202 = vmatpush1.msra.mxu0 %v38
  %203 = vmatprep.subr.mxu0 0.0
  %204 = vmatpush1.msra.mxu0 %v39
  %205 = vmatprep.subr.mxu0 0.0
  %206 = vmatpush1.msra.mxu0 %v40
  %207 = vmatprep.subr.mxu0 0.0
  %208 = vmatpush1.msra.mxu0 %v41
  %209 = vmatprep.subr.mxu0 0.0
  %210 = vmatpush1.msra.mxu0 %v42
  %211 = vmatprep.subr.mxu0 0.0
  %212 = vmatpush1.msra.mxu0 %v43
  %213 = vmatprep.subr.mxu0 0.0
  %214 = vmatpush1.msra.mxu0 %v44
  %215 = vmatprep.subr.mxu0 0.0
  %216 = vmatpush1.msra.mxu0 %v45
  %217 = vmatprep.subr.mxu0 0.0
  %218 = vmatpush1.msra.mxu0 %v46
  %219 = vmatprep.mubr.f32.mxu0 %v147
  %220 = vmatmul.mubr.f32.gmra.mrb[0].mxu0 %v11
  %v221 = vpop.f32.mrb[0].mxu0
  %v222 = vadd.f32 0.0, %v221
  %v223 = vpop.f32.mrb[0].mxu0
  %224 = vdwg.mxu0
  %225 = vmatprep.subr.mxu0 0.0
  %226 = vmatpush1.msra.mxu0 %v47
  %227 = vmatprep.subr.mxu0 0.0
  %228 = vmatpush1.msra.mxu0 %v48
  %229 = vmatprep.subr.mxu0 0.0
  %230 = vmatpush1.msra.mxu0 %v49
  %231 = vmatprep.subr.mxu0 0.0
  %232 = vmatpush1.msra.mxu0 %v50
  %233 = vmatprep.subr.mxu0 0.0
  %234 = vmatpush1.msra.mxu0 %v51
  %235 = vmatprep.subr.mxu0 0.0
  %236 = vmatpush1.msra.mxu0 %v52
  %237 = vmatprep.subr.mxu0 0.0
  %238 = vmatpush1.msra.mxu0 %v53
  %239 = vmatprep.subr.mxu0 0.0
  %240 = vmatpush1.msra.mxu0 %v54
  %241 = vmatprep.subr.mxu0 0.0
  %242 = vmatpush1.msra.mxu0 %v55
  %243 = vmatprep.subr.mxu0 0.0
  %244 = vmatpush1.msra.mxu0 %v56
  %245 = vmatprep.subr.mxu0 0.0
  %246 = vmatpush1.msra.mxu0 %v57
  %247 = vmatprep.subr.mxu0 0.0
  %248 = vmatpush1.msra.mxu0 %v58
  %249 = vmatprep.subr.mxu0 0.0
  %250 = vmatpush1.msra.mxu0 %v59
  %251 = vmatprep.subr.mxu0 0.0
  %252 = vmatpush1.msra.mxu0 %v60
  %253 = vmatprep.subr.mxu0 0.0
  %254 = vmatpush1.msra.mxu0 %v61
  %255 = vmatprep.subr.mxu0 0.0
  %256 = vmatpush1.msra.mxu0 %v62
  %257 = vmatprep.subr.mxu0 0.0
  %258 = vmatpush1.msra.mxu0 %v63
  %259 = vmatprep.subr.mxu0 0.0
  %260 = vmatpush1.msra.mxu0 %v64
  %261 = vmatprep.subr.mxu0 0.0
  %262 = vmatpush1.msra.mxu0 %v65
  %263 = vmatprep.subr.mxu0 0.0
  %264 = vmatpush1.msra.mxu0 %v66
  %265 = vmatprep.subr.mxu0 0.0
  %266 = vmatpush1.msra.mxu0 %v67
  %267 = vmatprep.subr.mxu0 0.0
  %268 = vmatpush1.msra.mxu0 %v68
  %269 = vmatprep.subr.mxu0 0.0
  %270 = vmatpush1.msra.mxu0 %v69
  %271 = vmatprep.subr.mxu0 0.0
  %272 = vmatpush1.msra.mxu0 %v70
  %273 = vmatprep.subr.mxu0 0.0
  %274 = vmatpush1.msra.mxu0 %v71
  %275 = vmatprep.subr.mxu0 0.0
  %276 = vmatpush1.msra.mxu0 %v72
  %277 = vmatprep.subr.mxu0 0.0
  %278 = vmatpush1.msra.mxu0 %v73
  %279 = vmatprep.subr.mxu0 0.0
  %280 = vmatpush1.msra.mxu0 %v74
  %281 = vmatprep.subr.mxu0 0.0
  %282 = vmatpush1.msra.mxu0 %v75
  %283 = vmatprep.subr.mxu0 0.0
  %284 = vmatpush1.msra.mxu0 %v76
  %285 = vmatprep.subr.mxu0 0.0
  %286 = vmatpush1.msra.mxu0 %v77
  %287 = vmatprep.subr.mxu0 0.0
  %288 = vmatpush1.msra.mxu0 %v78
  %289 = vmatprep.mubr.f32.mxu0 %v148
  %290 = vmatmul.mubr.f32.gmra.mrb[0].mxu0 %v12
  %v291 = vpop.f32.mrb[0].mxu0
  %v292 = vadd.f32 %v222, %v291
  %v293 = vpop.f32.mrb[0].mxu0
  %294 = vdwg.mxu0
  %295 = vmatprep.subr.mxu0 0.0
  %296 = vmatpush1.msra.mxu0 %v79
  %297 = vmatprep.subr.mxu0 0.0
  %298 = vmatpush1.msra.mxu0 %v80
  %299 = vmatprep.subr.mxu0 0.0
  %300 = vmatpush1.msra.mxu0 %v81
  %301 = vmatprep.subr.mxu0 0.0
  %302 = vmatpush1.msra.mxu0 %v82
  %303 = vmatprep.subr.mxu0 0.0
  %304 = vmatpush1.msra.mxu0 %v83
  %305 = vmatprep.subr.mxu0 0.0
  %306 = vmatpush1.msra.mxu0 %v84
  %307 = vmatprep.subr.mxu0 0.0
  %308 = vmatpush1.msra.mxu0 %v85
  %309 = vmatprep.subr.mxu0 0.0
  %310 = vmatpush1.msra.mxu0 %v86
  %311 = vmatprep.subr.mxu0 0.0
  %312 = vmatpush1.msra.mxu0 %v87
  %313 = vmatprep.subr.mxu0 0.0
  %314 = vmatpush1.msra.mxu0 %v88
  %315 = vmatprep.subr.mxu0 0.0
  %316 = vmatpush1.msra.mxu0 %v89
  %317 = vmatprep.subr.mxu0 0.0
  %318 = vmatpush1.msra.mxu0 %v90
  %319 = vmatprep.subr.mxu0 0.0
  %320 = vmatpush1.msra.mxu0 %v91
  %321 = vmatprep.subr.mxu0 0.0
  %322 = vmatpush1.msra.mxu0 %v92
  %323 = vmatprep.subr.mxu0 0.0
  %324 = vmatpush1.msra.mxu0 %v93
  %325 = vmatprep.subr.mxu0 0.0
  %326 = vmatpush1.msra.mxu0 %v94
  %327 = vmatprep.subr.mxu0 0.0
  %328 = vmatpush1.msra.mxu0 %v95
  %329 = vmatprep.subr.mxu0 0.0
  %330 = vmatpush1.msra.mxu0 %v96
  %331 = vmatprep.subr.mxu0 0.0
  %332 = vmatpush1.msra.mxu0 %v97
  %333 = vmatprep.subr.mxu0 0.0
  %334 = vmatpush1.msra.mxu0 %v98
  %335 = vmatprep.subr.mxu0 0.0
  %336 = vmatpush1.msra.mxu0 %v99
  %337 = vmatprep.subr.mxu0 0.0
  %338 = vmatpush1.msra.mxu0 %v100
  %339 = vmatprep.subr.mxu0 0.0
  %340 = vmatpush1.msra.mxu0 %v101
  %341 = vmatprep.subr.mxu0 0.0
  %342 = vmatpush1.msra.mxu0 %v102
  %343 = vmatprep.subr.mxu0 0.0
  %344 = vmatpush1.msra.mxu0 %v103
  %345 = vmatprep.subr.mxu0 0.0
  %346 = vmatpush1.msra.mxu0 %v104
  %347 = vmatprep.subr.mxu0 0.0
  %348 = vmatpush1.msra.mxu0 %v105
  %349 = vmatprep.subr.mxu0 0.0
  %350 = vmatpush1.msra.mxu0 %v106
  %351 = vmatprep.subr.mxu0 0.0
  %352 = vmatpush1.msra.mxu0 %v107
  %353 = vmatprep.subr.mxu0 0.0
  %354 = vmatpush1.msra.mxu0 %v108
  %355 = vmatprep.subr.mxu0 0.0
  %356 = vmatpush1.msra.mxu0 %v109
  %357 = vmatprep.subr.mxu0 0.0
  %358 = vmatpush1.msra.mxu0 %v110
  %359 = vmatprep.mubr.f32.mxu0 %v149
  %360 = vmatmul.mubr.f32.gmra.mrb[0].mxu0 %v13
  %v361 = vpop.f32.mrb[0].mxu0
  %v362 = vadd.f32 %v292, %v361
  %v363 = vpop.f32.mrb[0].mxu0
  %364 = vdwg.mxu0
  %365 = vmatprep.subr.mxu0 0.0
  %366 = vmatpush1.msra.mxu0 %v111
  %367 = vmatprep.subr.mxu0 0.0
  %368 = vmatpush1.msra.mxu0 %v112
  %369 = vmatprep.subr.mxu0 0.0
  %370 = vmatpush1.msra.mxu0 %v113
  %371 = vmatprep.subr.mxu0 0.0
  %372 = vmatpush1.msra.mxu0 %v114
  %373 = vmatprep.subr.mxu0 0.0
  %374 = vmatpush1.msra.mxu0 %v115
  %375 = vmatprep.subr.mxu0 0.0
  %376 = vmatpush1.msra.mxu0 %v116
  %377 = vmatprep.subr.mxu0 0.0
  %378 = vmatpush1.msra.mxu0 %v117
  %379 = vmatprep.subr.mxu0 0.0
  %380 = vmatpush1.msra.mxu0 %v118
  %381 = vmatprep.subr.mxu0 0.0
  %382 = vmatpush1.msra.mxu0 %v119
  %383 = vmatprep.subr.mxu0 0.0
  %384 = vmatpush1.msra.mxu0 %v120
  %385 = vmatprep.subr.mxu0 0.0
  %386 = vmatpush1.msra.mxu0 %v121
  %387 = vmatprep.subr.mxu0 0.0
  %388 = vmatpush1.msra.mxu0 %v122
  %389 = vmatprep.subr.mxu0 0.0
  %390 = vmatpush1.msra.mxu0 %v123
  %391 = vmatprep.subr.mxu0 0.0
  %392 = vmatpush1.msra.mxu0 %v124
  %393 = vmatprep.subr.mxu0 0.0
  %394 = vmatpush1.msra.mxu0 %v125
  %395 = vmatprep.subr.mxu0 0.0
  %396 = vmatpush1.msra.mxu0 %v126
  %397 = vmatprep.subr.mxu0 0.0
  %398 = vmatpush1.msra.mxu0 %v127
  %399 = vmatprep.subr.mxu0 0.0
  %400 = vmatpush1.msra.mxu0 %v128
  %401 = vmatprep.subr.mxu0 0.0
  %402 = vmatpush1.msra.mxu0 %v129
  %403 = vmatprep.subr.mxu0 0.0
  %404 = vmatpush1.msra.mxu0 %v130
  %405 = vmatprep.subr.mxu0 0.0
  %406 = vmatpush1.msra.mxu0 %v131
  %407 = vmatprep.subr.mxu0 0.0
  %408 = vmatpush1.msra.mxu0 %v132
  %409 = vmatprep.subr.mxu0 0.0
  %410 = vmatpush1.msra.mxu0 %v133
  %411 = vmatprep.subr.mxu0 0.0
  %412 = vmatpush1.msra.mxu0 %v134
  %413 = vmatprep.subr.mxu0 0.0
  %414 = vmatpush1.msra.mxu0 %v135
  %415 = vmatprep.subr.mxu0 0.0
  %416 = vmatpush1.msra.mxu0 %v136
  %417 = vmatprep.subr.mxu0 0.0
  %418 = vmatpush1.msra.mxu0 %v137
  %419 = vmatprep.subr.mxu0 0.0
  %420 = vmatpush1.msra.mxu0 %v138
  %421 = vmatprep.subr.mxu0 0.0
  %422 = vmatpush1.msra.mxu0 %v139
  %423 = vmatprep.subr.mxu0 0.0
  %424 = vmatpush1.msra.mxu0 %v140
  %425 = vmatprep.subr.mxu0 0.0
  %426 = vmatpush1.msra.mxu0 %v141
  %427 = vmatprep.subr.mxu0 0.0
  %428 = vmatpush1.msra.mxu0 %v142
  %429 = vmatprep.mubr.f32.mxu0 %v150
  %430 = vmatmul.mubr.f32.gmra.mrb[0].mxu0 %v14
  %v431 = vpop.f32.mrb[0].mxu0
  %v432 = vadd.f32 %v362, %v431
  %v433 = vpop.f32.mrb[0].mxu0
  %434 = vdwg.mxu0
  %435 = vst [vmem:[%s2] sm:$0xf] %v432
  // Predicated region
  $region10: #{time_attention.1} parent=0 // pred_check
    _
  $region11: #{time_attention.1} parent=0 // pred_check_branch
    %437 = sbr.rel (0) target = $region13
  $region12: #{time_attention.1} parent=0 // pred_region
    _
  $region13: #{time_attention.1} parent=0 // pred_fallthru
    _
  // Predicated region
  $region14: #{time_attention.1} parent=0 // pred_check
    _
  $region15: #{time_attention.1} parent=0 // pred_check_branch
    %439 = sbr.rel (0) target = $region17
  $region16: #{time_attention.1} parent=0 // pred_region
    _
  $region17: #{time_attention.1} parent=0 // pred_fallthru
    _

</llo_original>
